<compile_context>
chip_gen: v7x
topology: tpu7x:2x2x1
jax: 0.10.0
libtpu: 0.0.40
codegen_flags: <defaults>
</compile_context>

<pallas_src>
import functools

import jax
import jax.numpy as jnp
from jax.experimental import pallas as pl
from jax.experimental.pallas import tpu as pltpu

# --- module hyper-parameters (from the PyTorch script) ---
BATCH_SIZE = 1
HIDDEN_SIZE = 4
INPUT_SIZE = 4
NUM_LAYERS = 1  # single layer (matches the spec's num_layers=1)
SEQ_LEN = 8     # small example sequence length


def rnn_kernel(packed_ref, out_ref, pre_ref, *, seq_len, batch, input_size, hidden):
    """Single-invocation RNN forward.

    packed_ref: (seq*batch + input + hidden + 1, max(input, hidden)) f32 VMEM
                rows: [x_flat | W_ih^T | W_hh^T | (b_ih + b_hh)]
    out_ref:    (1, seq*batch*hidden) f32 VMEM   (lane-dense output row)
    pre_ref:    (seq*batch, hidden)   f32 VMEM scratch (staged pre-activations)
    """
    sb = seq_len * batch
    r_wih = sb
    r_whh = sb + input_size
    r_bias = r_whh + hidden

    # Static views into the single packed slab (one input DMA upstream).
    x = packed_ref[0:sb, 0:input_size]                         # (S*B, I)
    wih_t = packed_ref[r_wih:r_wih + input_size, 0:hidden]     # (I, H)
    bias = packed_ref[r_bias:r_bias + 1, 0:hidden]             # (1, H)
    # W_hh^T rows, hoisted once (loop-invariant VMEM loads).
    whh_rows = [
        packed_ref[r_whh + j:r_whh + j + 1, 0:hidden] for j in range(hidden)
    ]

    # Prologue: input projection + folded bias for ALL timesteps in one MXU
    # matmul, staged into VMEM scratch so the serial loop consumes it via vld.
    pre_ref[...] = (
        jnp.dot(x, wih_t, preferred_element_type=jnp.float32) + bias
    )

    bh = batch * hidden
    # Serial recurrence, fully unrolled (seq_len small & static).  The hidden
    # state is a jnp carry in vregs; each step is VPU muls/adds + EUP tanh —
    # no MXU on the critical dependence chain.
    h = jnp.zeros((batch, hidden), jnp.float32)
    for t in range(seq_len):
        pre_t = pre_ref[t * batch:(t + 1) * batch, :]          # (B, H) VMEM load
        # h @ W_hh^T as `hidden` scaled-row adds:
        #   rec[b, k] = sum_j h[b, j] * W_hh^T[j, k]
        rec = h[:, 0:1] * whh_rows[0]
        for j in range(1, hidden):
            rec = rec + h[:, j:j + 1] * whh_rows[j]
        h = jnp.tanh(pre_t + rec)
        # Lane-dense per-step store into the (1, S*B*H) output row.
        out_ref[0:1, t * bh:(t + 1) * bh] = h.reshape(1, bh).astype(out_ref.dtype)


def rnn_forward(x, w_ih, w_hh, b_ih, b_hh):
    """x: (seq_len, batch, input_size) f32 -> (seq_len*batch, hidden) f32."""
    seq_len, batch, input_size = x.shape
    hidden = w_ih.shape[0]
    ncols = max(input_size, hidden)

    def pad_cols(a):
        return jnp.pad(a, ((0, 0), (0, ncols - a.shape[1])))

    # Layout plumbing done once in XLA, outside the serial chain:
    x_flat = x.reshape(seq_len * batch, input_size)            # time-major
    packed = jnp.concatenate(
        [
            pad_cols(x_flat),                                  # rows [0, S*B)
            pad_cols(w_ih.T),                                  # rows [S*B, S*B+I)
            pad_cols(w_hh.T),                                  # next H rows
            pad_cols((b_ih + b_hh).reshape(1, hidden)),        # last row (folded bias)
        ],
        axis=0,
    )

    kernel = functools.partial(
        rnn_kernel,
        seq_len=seq_len,
        batch=batch,
        input_size=input_size,
        hidden=hidden,
    )

    out_row = pl.pallas_call(
        kernel,
        out_shape=jax.ShapeDtypeStruct((1, seq_len * batch * hidden), jnp.float32),
        in_specs=[pl.BlockSpec(memory_space=pltpu.MemorySpace.VMEM)],
        out_specs=pl.BlockSpec(memory_space=pltpu.MemorySpace.VMEM),
        scratch_shapes=[pltpu.VMEM((seq_len * batch, hidden), jnp.float32)],
    )(packed)

    # matches out.view(-1, hidden_size) in the PyTorch module
    return out_row.reshape(seq_len * batch, hidden)


def rnn_reference(x, w_ih, w_hh, b_ih, b_hh):
    """Pure-JAX reference (lax.scan) for a sanity check."""
    def step(h, x_t):
        h_new = jnp.tanh(x_t @ w_ih.T + b_ih + h @ w_hh.T + b_hh)
        return h_new, h_new

    h0 = jnp.zeros((x.shape[1], w_ih.shape[0]), jnp.float32)
    _, out = jax.lax.scan(step, h0, x)
    return out.reshape(-1, w_ih.shape[0])


if __name__ == "__main__":
    key = jax.random.PRNGKey(0)
    k_x, k_wih, k_whh, k_bih, k_bhh = jax.random.split(key, 5)

    # Deterministic parameter init (torch.nn.RNN uses U(-1/sqrt(H), 1/sqrt(H)))
    bound = 1.0 / jnp.sqrt(jnp.float32(HIDDEN_SIZE))
    w_ih = jax.random.uniform(k_wih, (HIDDEN_SIZE, INPUT_SIZE), jnp.float32, -bound, bound)
    w_hh = jax.random.uniform(k_whh, (HIDDEN_SIZE, HIDDEN_SIZE), jnp.float32, -bound, bound)
    b_ih = jax.random.uniform(k_bih, (HIDDEN_SIZE,), jnp.float32, -bound, bound)
    b_hh = jax.random.uniform(k_bhh, (HIDDEN_SIZE,), jnp.float32, -bound, bound)

    # layout: (seq_len, batch, input_size) — PyTorch default (batch_first=False)
    x = jax.random.normal(k_x, (SEQ_LEN, BATCH_SIZE, INPUT_SIZE), jnp.float32)

    out = rnn_forward(x, w_ih, w_hh, b_ih, b_hh)
    out = jax.block_until_ready(out)

    ref = rnn_reference(x, w_ih, w_hh, b_ih, b_hh)
    assert out.shape == (SEQ_LEN * BATCH_SIZE, HIDDEN_SIZE)
    assert jnp.allclose(out, ref, atol=1e-5, rtol=1e-5)

    print("KERNEL_OK")
</pallas_src>

<mosaic_0001>
module attributes {stable_mosaic.version = 11 : i64} {
  func.func @rnn_kernel(%arg0: memref<17x4xf32, #tpu.memory_space<vmem>>, %arg1: memref<1x32xf32, #tpu.memory_space<vmem>>, %arg2: memref<8x4xf32, #tpu.memory_space<vmem>>) attributes {dimension_semantics = [], scalar_prefetch = 0 : i64, scratch_operands = 1 : i64, tpu.core_type = #tpu.core_type<tc>} {
    %c0 = arith.constant 0 : index
    %c0_0 = arith.constant 0 : index
    %0 = vector.load %arg0[%c0, %c0_0] : memref<17x4xf32, #tpu.memory_space<vmem>>, vector<8x4xf32>
    %c8 = arith.constant 8 : index
    %c0_1 = arith.constant 0 : index
    %1 = vector.load %arg0[%c8, %c0_1] : memref<17x4xf32, #tpu.memory_space<vmem>>, vector<4x4xf32>
    %c16 = arith.constant 16 : index
    %c0_2 = arith.constant 0 : index
    %2 = vector.load %arg0[%c16, %c0_2] : memref<17x4xf32, #tpu.memory_space<vmem>>, vector<1x4xf32>
    %c12 = arith.constant 12 : index
    %c0_3 = arith.constant 0 : index
    %3 = vector.load %arg0[%c12, %c0_3] : memref<17x4xf32, #tpu.memory_space<vmem>>, vector<1x4xf32>
    %c13 = arith.constant 13 : index
    %c0_4 = arith.constant 0 : index
    %4 = vector.load %arg0[%c13, %c0_4] : memref<17x4xf32, #tpu.memory_space<vmem>>, vector<1x4xf32>
    %c14 = arith.constant 14 : index
    %c0_5 = arith.constant 0 : index
    %5 = vector.load %arg0[%c14, %c0_5] : memref<17x4xf32, #tpu.memory_space<vmem>>, vector<1x4xf32>
    %c15 = arith.constant 15 : index
    %c0_6 = arith.constant 0 : index
    %6 = vector.load %arg0[%c15, %c0_6] : memref<17x4xf32, #tpu.memory_space<vmem>>, vector<1x4xf32>
    %cst = arith.constant dense<0.000000e+00> : vector<8x4xf32>
    %7 = tpu.matmul %0, %1, %cst {dimension_numbers = #tpu.dot_dimension_numbers<[1], [0], [0], [1], [0, 0, 1, 1], [], []>} : vector<8x4xf32>, vector<4x4xf32>, vector<8x4xf32> -> vector<8x4xf32>
    %8 = vector.broadcast %2 : vector<1x4xf32> to vector<8x4xf32>
    %9 = arith.addf %7, %8 : vector<8x4xf32>
    %c0_7 = arith.constant 0 : index
    %c0_8 = arith.constant 0 : index
    %10 = vector.load %arg2[%c0_7, %c0_8] : memref<8x4xf32, #tpu.memory_space<vmem>>, vector<8x4xf32>
    tpu.vector_store %arg2[%c0_7, %c0_8], %9 {strides = array<i32>} : memref<8x4xf32, #tpu.memory_space<vmem>>, vector<8x4xf32>,
    %cst_9 = arith.constant 0.000000e+00 : f32
    %11 = vector.broadcast %cst_9 : f32 to vector<1x4xf32>
    %c0_10 = arith.constant 0 : index
    %c0_11 = arith.constant 0 : index
    %12 = vector.load %arg2[%c0_10, %c0_11] : memref<8x4xf32, #tpu.memory_space<vmem>>, vector<1x4xf32>
    %13 = vector.extract_strided_slice %11 {offsets = [0, 0], sizes = [1, 1], strides = [1, 1]} : vector<1x4xf32> to vector<1x1xf32>
    %14 = vector.broadcast %13 : vector<1x1xf32> to vector<1x4xf32>
    %15 = arith.mulf %14, %3 : vector<1x4xf32>
    %16 = vector.extract_strided_slice %11 {offsets = [0, 1], sizes = [1, 1], strides = [1, 1]} : vector<1x4xf32> to vector<1x1xf32>
    %17 = vector.broadcast %16 : vector<1x1xf32> to vector<1x4xf32>
    %18 = arith.mulf %17, %4 : vector<1x4xf32>
    %19 = arith.addf %15, %18 : vector<1x4xf32>
    %20 = vector.extract_strided_slice %11 {offsets = [0, 2], sizes = [1, 1], strides = [1, 1]} : vector<1x4xf32> to vector<1x1xf32>
    %21 = vector.broadcast %20 : vector<1x1xf32> to vector<1x4xf32>
    %22 = arith.mulf %21, %5 : vector<1x4xf32>
    %23 = arith.addf %19, %22 : vector<1x4xf32>
    %24 = vector.extract_strided_slice %11 {offsets = [0, 3], sizes = [1, 1], strides = [1, 1]} : vector<1x4xf32> to vector<1x1xf32>
    %25 = vector.broadcast %24 : vector<1x1xf32> to vector<1x4xf32>
    %26 = arith.mulf %25, %6 : vector<1x4xf32>
    %27 = arith.addf %23, %26 : vector<1x4xf32>
    %28 = arith.addf %12, %27 : vector<1x4xf32>
    %29 = math.tanh %28 : vector<1x4xf32>
    %c0_12 = arith.constant 0 : index
    %c0_13 = arith.constant 0 : index
    %30 = vector.load %arg1[%c0_12, %c0_13] : memref<1x32xf32, #tpu.memory_space<vmem>>, vector<1x4xf32>
    tpu.vector_store %arg1[%c0_12, %c0_13], %29 {strides = array<i32>} : memref<1x32xf32, #tpu.memory_space<vmem>>, vector<1x4xf32>,
    %c1 = arith.constant 1 : index
    %c0_14 = arith.constant 0 : index
    %31 = vector.load %arg2[%c1, %c0_14] : memref<8x4xf32, #tpu.memory_space<vmem>>, vector<1x4xf32>
    %32 = vector.extract_strided_slice %29 {offsets = [0, 0], sizes = [1, 1], strides = [1, 1]} : vector<1x4xf32> to vector<1x1xf32>
    %33 = vector.broadcast %32 : vector<1x1xf32> to vector<1x4xf32>
    %34 = arith.mulf %33, %3 : vector<1x4xf32>
    %35 = vector.extract_strided_slice %29 {offsets = [0, 1], sizes = [1, 1], strides = [1, 1]} : vector<1x4xf32> to vector<1x1xf32>
    %36 = vector.broadcast %35 : vector<1x1xf32> to vector<1x4xf32>
    %37 = arith.mulf %36, %4 : vector<1x4xf32>
    %38 = arith.addf %34, %37 : vector<1x4xf32>
    %39 = vector.extract_strided_slice %29 {offsets = [0, 2], sizes = [1, 1], strides = [1, 1]} : vector<1x4xf32> to vector<1x1xf32>
    %40 = vector.broadcast %39 : vector<1x1xf32> to vector<1x4xf32>
    %41 = arith.mulf %40, %5 : vector<1x4xf32>
    %42 = arith.addf %38, %41 : vector<1x4xf32>
    %43 = vector.extract_strided_slice %29 {offsets = [0, 3], sizes = [1, 1], strides = [1, 1]} : vector<1x4xf32> to vector<1x1xf32>
    %44 = vector.broadcast %43 : vector<1x1xf32> to vector<1x4xf32>
    %45 = arith.mulf %44, %6 : vector<1x4xf32>
    %46 = arith.addf %42, %45 : vector<1x4xf32>
    %47 = arith.addf %31, %46 : vector<1x4xf32>
    %48 = math.tanh %47 : vector<1x4xf32>
    %c0_15 = arith.constant 0 : index
    %c4 = arith.constant 4 : index
    %49 = vector.load %arg1[%c0_15, %c4] : memref<1x32xf32, #tpu.memory_space<vmem>>, vector<1x4xf32>
    tpu.vector_store %arg1[%c0_15, %c4], %48 {strides = array<i32>} : memref<1x32xf32, #tpu.memory_space<vmem>>, vector<1x4xf32>,
    %c2 = arith.constant 2 : index
    %c0_16 = arith.constant 0 : index
    %50 = vector.load %arg2[%c2, %c0_16] : memref<8x4xf32, #tpu.memory_space<vmem>>, vector<1x4xf32>
    %51 = vector.extract_strided_slice %48 {offsets = [0, 0], sizes = [1, 1], strides = [1, 1]} : vector<1x4xf32> to vector<1x1xf32>
    %52 = vector.broadcast %51 : vector<1x1xf32> to vector<1x4xf32>
    %53 = arith.mulf %52, %3 : vector<1x4xf32>
    %54 = vector.extract_strided_slice %48 {offsets = [0, 1], sizes = [1, 1], strides = [1, 1]} : vector<1x4xf32> to vector<1x1xf32>
    %55 = vector.broadcast %54 : vector<1x1xf32> to vector<1x4xf32>
    %56 = arith.mulf %55, %4 : vector<1x4xf32>
    %57 = arith.addf %53, %56 : vector<1x4xf32>
    %58 = vector.extract_strided_slice %48 {offsets = [0, 2], sizes = [1, 1], strides = [1, 1]} : vector<1x4xf32> to vector<1x1xf32>
    %59 = vector.broadcast %58 : vector<1x1xf32> to vector<1x4xf32>
    %60 = arith.mulf %59, %5 : vector<1x4xf32>
    %61 = arith.addf %57, %60 : vector<1x4xf32>
    %62 = vector.extract_strided_slice %48 {offsets = [0, 3], sizes = [1, 1], strides = [1, 1]} : vector<1x4xf32> to vector<1x1xf32>
    %63 = vector.broadcast %62 : vector<1x1xf32> to vector<1x4xf32>
    %64 = arith.mulf %63, %6 : vector<1x4xf32>
    %65 = arith.addf %61, %64 : vector<1x4xf32>
    %66 = arith.addf %50, %65 : vector<1x4xf32>
    %67 = math.tanh %66 : vector<1x4xf32>
    %c0_17 = arith.constant 0 : index
    %c8_18 = arith.constant 8 : index
    %68 = vector.load %arg1[%c0_17, %c8_18] : memref<1x32xf32, #tpu.memory_space<vmem>>, vector<1x4xf32>
    tpu.vector_store %arg1[%c0_17, %c8_18], %67 {strides = array<i32>} : memref<1x32xf32, #tpu.memory_space<vmem>>, vector<1x4xf32>,
    %c3 = arith.constant 3 : index
    %c0_19 = arith.constant 0 : index
    %69 = vector.load %arg2[%c3, %c0_19] : memref<8x4xf32, #tpu.memory_space<vmem>>, vector<1x4xf32>
    %70 = vector.extract_strided_slice %67 {offsets = [0, 0], sizes = [1, 1], strides = [1, 1]} : vector<1x4xf32> to vector<1x1xf32>
    %71 = vector.broadcast %70 : vector<1x1xf32> to vector<1x4xf32>
    %72 = arith.mulf %71, %3 : vector<1x4xf32>
    %73 = vector.extract_strided_slice %67 {offsets = [0, 1], sizes = [1, 1], strides = [1, 1]} : vector<1x4xf32> to vector<1x1xf32>
    %74 = vector.broadcast %73 : vector<1x1xf32> to vector<1x4xf32>
    %75 = arith.mulf %74, %4 : vector<1x4xf32>
    %76 = arith.addf %72, %75 : vector<1x4xf32>
    %77 = vector.extract_strided_slice %67 {offsets = [0, 2], sizes = [1, 1], strides = [1, 1]} : vector<1x4xf32> to vector<1x1xf32>
    %78 = vector.broadcast %77 : vector<1x1xf32> to vector<1x4xf32>
    %79 = arith.mulf %78, %5 : vector<1x4xf32>
    %80 = arith.addf %76, %79 : vector<1x4xf32>
    %81 = vector.extract_strided_slice %67 {offsets = [0, 3], sizes = [1, 1], strides = [1, 1]} : vector<1x4xf32> to vector<1x1xf32>
    %82 = vector.broadcast %81 : vector<1x1xf32> to vector<1x4xf32>
    %83 = arith.mulf %82, %6 : vector<1x4xf32>
    %84 = arith.addf %80, %83 : vector<1x4xf32>
    %85 = arith.addf %69, %84 : vector<1x4xf32>
    %86 = math.tanh %85 : vector<1x4xf32>
    %c0_20 = arith.constant 0 : index
    %c12_21 = arith.constant 12 : index
    %87 = vector.load %arg1[%c0_20, %c12_21] : memref<1x32xf32, #tpu.memory_space<vmem>>, vector<1x4xf32>
    tpu.vector_store %arg1[%c0_20, %c12_21], %86 {strides = array<i32>} : memref<1x32xf32, #tpu.memory_space<vmem>>, vector<1x4xf32>,
    %c4_22 = arith.constant 4 : index
    %c0_23 = arith.constant 0 : index
    %88 = vector.load %arg2[%c4_22, %c0_23] : memref<8x4xf32, #tpu.memory_space<vmem>>, vector<1x4xf32>
    %89 = vector.extract_strided_slice %86 {offsets = [0, 0], sizes = [1, 1], strides = [1, 1]} : vector<1x4xf32> to vector<1x1xf32>
    %90 = vector.broadcast %89 : vector<1x1xf32> to vector<1x4xf32>
    %91 = arith.mulf %90, %3 : vector<1x4xf32>
    %92 = vector.extract_strided_slice %86 {offsets = [0, 1], sizes = [1, 1], strides = [1, 1]} : vector<1x4xf32> to vector<1x1xf32>
    %93 = vector.broadcast %92 : vector<1x1xf32> to vector<1x4xf32>
    %94 = arith.mulf %93, %4 : vector<1x4xf32>
    %95 = arith.addf %91, %94 : vector<1x4xf32>
    %96 = vector.extract_strided_slice %86 {offsets = [0, 2], sizes = [1, 1], strides = [1, 1]} : vector<1x4xf32> to vector<1x1xf32>
    %97 = vector.broadcast %96 : vector<1x1xf32> to vector<1x4xf32>
    %98 = arith.mulf %97, %5 : vector<1x4xf32>
    %99 = arith.addf %95, %98 : vector<1x4xf32>
    %100 = vector.extract_strided_slice %86 {offsets = [0, 3], sizes = [1, 1], strides = [1, 1]} : vector<1x4xf32> to vector<1x1xf32>
    %101 = vector.broadcast %100 : vector<1x1xf32> to vector<1x4xf32>
    %102 = arith.mulf %101, %6 : vector<1x4xf32>
    %103 = arith.addf %99, %102 : vector<1x4xf32>
    %104 = arith.addf %88, %103 : vector<1x4xf32>
    %105 = math.tanh %104 : vector<1x4xf32>
    %c0_24 = arith.constant 0 : index
    %c16_25 = arith.constant 16 : index
    %106 = vector.load %arg1[%c0_24, %c16_25] : memref<1x32xf32, #tpu.memory_space<vmem>>, vector<1x4xf32>
    tpu.vector_store %arg1[%c0_24, %c16_25], %105 {strides = array<i32>} : memref<1x32xf32, #tpu.memory_space<vmem>>, vector<1x4xf32>,
    %c5 = arith.constant 5 : index
    %c0_26 = arith.constant 0 : index
    %107 = vector.load %arg2[%c5, %c0_26] : memref<8x4xf32, #tpu.memory_space<vmem>>, vector<1x4xf32>
    %108 = vector.extract_strided_slice %105 {offsets = [0, 0], sizes = [1, 1], strides = [1, 1]} : vector<1x4xf32> to vector<1x1xf32>
    %109 = vector.broadcast %108 : vector<1x1xf32> to vector<1x4xf32>
    %110 = arith.mulf %109, %3 : vector<1x4xf32>
    %111 = vector.extract_strided_slice %105 {offsets = [0, 1], sizes = [1, 1], strides = [1, 1]} : vector<1x4xf32> to vector<1x1xf32>
    %112 = vector.broadcast %111 : vector<1x1xf32> to vector<1x4xf32>
    %113 = arith.mulf %112, %4 : vector<1x4xf32>
    %114 = arith.addf %110, %113 : vector<1x4xf32>
    %115 = vector.extract_strided_slice %105 {offsets = [0, 2], sizes = [1, 1], strides = [1, 1]} : vector<1x4xf32> to vector<1x1xf32>
    %116 = vector.broadcast %115 : vector<1x1xf32> to vector<1x4xf32>
    %117 = arith.mulf %116, %5 : vector<1x4xf32>
    %118 = arith.addf %114, %117 : vector<1x4xf32>
    %119 = vector.extract_strided_slice %105 {offsets = [0, 3], sizes = [1, 1], strides = [1, 1]} : vector<1x4xf32> to vector<1x1xf32>
    %120 = vector.broadcast %119 : vector<1x1xf32> to vector<1x4xf32>
    %121 = arith.mulf %120, %6 : vector<1x4xf32>
    %122 = arith.addf %118, %121 : vector<1x4xf32>
    %123 = arith.addf %107, %122 : vector<1x4xf32>
    %124 = math.tanh %123 : vector<1x4xf32>
    %c0_27 = arith.constant 0 : index
    %c20 = arith.constant 20 : index
    %125 = vector.load %arg1[%c0_27, %c20] : memref<1x32xf32, #tpu.memory_space<vmem>>, vector<1x4xf32>
    tpu.vector_store %arg1[%c0_27, %c20], %124 {strides = array<i32>} : memref<1x32xf32, #tpu.memory_space<vmem>>, vector<1x4xf32>,
    %c6 = arith.constant 6 : index
    %c0_28 = arith.constant 0 : index
    %126 = vector.load %arg2[%c6, %c0_28] : memref<8x4xf32, #tpu.memory_space<vmem>>, vector<1x4xf32>
    %127 = vector.extract_strided_slice %124 {offsets = [0, 0], sizes = [1, 1], strides = [1, 1]} : vector<1x4xf32> to vector<1x1xf32>
    %128 = vector.broadcast %127 : vector<1x1xf32> to vector<1x4xf32>
    %129 = arith.mulf %128, %3 : vector<1x4xf32>
    %130 = vector.extract_strided_slice %124 {offsets = [0, 1], sizes = [1, 1], strides = [1, 1]} : vector<1x4xf32> to vector<1x1xf32>
    %131 = vector.broadcast %130 : vector<1x1xf32> to vector<1x4xf32>
    %132 = arith.mulf %131, %4 : vector<1x4xf32>
    %133 = arith.addf %129, %132 : vector<1x4xf32>
    %134 = vector.extract_strided_slice %124 {offsets = [0, 2], sizes = [1, 1], strides = [1, 1]} : vector<1x4xf32> to vector<1x1xf32>
    %135 = vector.broadcast %134 : vector<1x1xf32> to vector<1x4xf32>
    %136 = arith.mulf %135, %5 : vector<1x4xf32>
    %137 = arith.addf %133, %136 : vector<1x4xf32>
    %138 = vector.extract_strided_slice %124 {offsets = [0, 3], sizes = [1, 1], strides = [1, 1]} : vector<1x4xf32> to vector<1x1xf32>
    %139 = vector.broadcast %138 : vector<1x1xf32> to vector<1x4xf32>
    %140 = arith.mulf %139, %6 : vector<1x4xf32>
    %141 = arith.addf %137, %140 : vector<1x4xf32>
    %142 = arith.addf %126, %141 : vector<1x4xf32>
    %143 = math.tanh %142 : vector<1x4xf32>
    %c0_29 = arith.constant 0 : index
    %c24 = arith.constant 24 : index
    %144 = vector.load %arg1[%c0_29, %c24] : memref<1x32xf32, #tpu.memory_space<vmem>>, vector<1x4xf32>
    tpu.vector_store %arg1[%c0_29, %c24], %143 {strides = array<i32>} : memref<1x32xf32, #tpu.memory_space<vmem>>, vector<1x4xf32>,
    %c7 = arith.constant 7 : index
    %c0_30 = arith.constant 0 : index
    %145 = vector.load %arg2[%c7, %c0_30] : memref<8x4xf32, #tpu.memory_space<vmem>>, vector<1x4xf32>
    %146 = vector.extract_strided_slice %143 {offsets = [0, 0], sizes = [1, 1], strides = [1, 1]} : vector<1x4xf32> to vector<1x1xf32>
    %147 = vector.broadcast %146 : vector<1x1xf32> to vector<1x4xf32>
    %148 = arith.mulf %147, %3 : vector<1x4xf32>
    %149 = vector.extract_strided_slice %143 {offsets = [0, 1], sizes = [1, 1], strides = [1, 1]} : vector<1x4xf32> to vector<1x1xf32>
    %150 = vector.broadcast %149 : vector<1x1xf32> to vector<1x4xf32>
    %151 = arith.mulf %150, %4 : vector<1x4xf32>
    %152 = arith.addf %148, %151 : vector<1x4xf32>
    %153 = vector.extract_strided_slice %143 {offsets = [0, 2], sizes = [1, 1], strides = [1, 1]} : vector<1x4xf32> to vector<1x1xf32>
    %154 = vector.broadcast %153 : vector<1x1xf32> to vector<1x4xf32>
    %155 = arith.mulf %154, %5 : vector<1x4xf32>
    %156 = arith.addf %152, %155 : vector<1x4xf32>
    %157 = vector.extract_strided_slice %143 {offsets = [0, 3], sizes = [1, 1], strides = [1, 1]} : vector<1x4xf32> to vector<1x1xf32>
    %158 = vector.broadcast %157 : vector<1x1xf32> to vector<1x4xf32>
    %159 = arith.mulf %158, %6 : vector<1x4xf32>
    %160 = arith.addf %156, %159 : vector<1x4xf32>
    %161 = arith.addf %145, %160 : vector<1x4xf32>
    %162 = math.tanh %161 : vector<1x4xf32>
    %c0_31 = arith.constant 0 : index
    %c28 = arith.constant 28 : index
    %163 = vector.load %arg1[%c0_31, %c28] : memref<1x32xf32, #tpu.memory_space<vmem>>, vector<1x4xf32>
    tpu.vector_store %arg1[%c0_31, %c28], %162 {strides = array<i32>} : memref<1x32xf32, #tpu.memory_space<vmem>>, vector<1x4xf32>,
    return
  }
}

</mosaic_0001>

<llo_original>
// kernel: tpu_custom_call.1
$region0: #{tpu_custom_call.1}
  #allocation0 [shape = 'u32[]', space=smem, size = 0x4, offset = 0x4, fixed_abs, tag = 'smem constant byte address 0x4 - core index']
  #allocation1 [shape = 'u32[144,128]{1,0:T(1,128)}', space=vmem, size = 0x12000, scoped, tag = 'internal scratch']
  #allocation2 [shape = 'f32[8,4]{1,0:T(8,128)}', space=vmem, size = 0x1000, scoped, tag = 'scratch operand']
  %s0 = inlined_call_operand.vmem [shape: f32[17,4], index: 0, kind: input, shape index: {}]
  %s1 = inlined_call_operand.hbm [shape: f32[1,32], index: 1, kind: output, shape index: {}]
  %s2 = sld [smem:[#allocation0]]
  $region14: #{tpu_custom_call.1} parent=0
    _
  %s4 = ssub.s32 1, %s2
  %s5 = scalar_select 0, %s4, %s2
  $region1: #{tpu_custom_call.1} parent=0
    #allocation3 [shape = 'u8[512]{0}', space=vmem, size = 0x400, scoped, tag = 'output window, operand 0, single buffered']
    #allocation4 [shape = 's32[1]{0}', space=sflag, size = 0x4, scoped, tag = 'scoped memory for tpu_custom_call.1']
    %6 = vsyncpa [#allocation4], 0
    // Predicated region
    $region2: #{tpu_custom_call.1} parent=1 // pred_check
      _
    $region3: #{tpu_custom_call.1} parent=1 // pred_check_branch
      %8 = sbr.rel (0) target = $region5
    $region4: #{tpu_custom_call.1} parent=1 // pred_region
      _
    $region5: #{tpu_custom_call.1} parent=1 // pred_fallthru
      _
    %v9 = vld [vmem:[%s0] sm:$0xff]
    %v10 = vld [vmem:[%s0 + $0x8] sm:$0xf]
    %v11 = vld [vmem:[%s0 + $0x10] sm:$0x1]
    %v12 = vld [vmem:[%s0 + $0xc] sm:$0x1]
    %v13 = vld [vmem:[%s0 + $0xd] sm:$0x1]
    %v14 = vld [vmem:[%s0 + $0xe] sm:$0x1]
    %v15 = vld [vmem:[%s0 + $0xf] sm:$0x1]
    %v16 = vlaneseq
    %v17 = vshrl.u32 %v16, 7
    %v18 = vsub.s32 0, %v17
    %v19 = vrot.slane %v11, %v18
    %vm20 = vcmask 31744
    %v22 = vsel %vm20, %v9, 0
    %vm24 = vcmask 1043456
    %v26 = vsel %vm24, %v10, 0
    %28 = vmatprep.subr.mxu0 0.0
    %29 = vmatpush1.msra.mxu0 %v26
    %30 = vmatprep.subr.mxu0 0.0
    %31 = vmatpush1.msra.mxu0 0.0
    %32 = vmatprep.subr.mxu0 0.0
    %33 = vmatpush1.msra.mxu0 0.0
    %34 = vmatprep.subr.mxu0 0.0
    %35 = vmatpush1.msra.mxu0 0.0
    %36 = vmatprep.subr.mxu0 0.0
    %37 = vmatpush1.msra.mxu0 0.0
    %38 = vmatprep.subr.mxu0 0.0
    %39 = vmatpush1.msra.mxu0 0.0
    %40 = vmatprep.subr.mxu0 0.0
    %41 = vmatpush1.msra.mxu0 0.0
    %42 = vmatprep.subr.mxu0 0.0
    %43 = vmatpush1.msra.mxu0 0.0
    %44 = vmatprep.subr.mxu0 0.0
    %45 = vmatpush1.msra.mxu0 0.0
    %46 = vmatprep.subr.mxu0 0.0
    %47 = vmatpush1.msra.mxu0 0.0
    %48 = vmatprep.subr.mxu0 0.0
    %49 = vmatpush1.msra.mxu0 0.0
    %50 = vmatprep.subr.mxu0 0.0
    %51 = vmatpush1.msra.mxu0 0.0
    %52 = vmatprep.subr.mxu0 0.0
    %53 = vmatpush1.msra.mxu0 0.0
    %54 = vmatprep.subr.mxu0 0.0
    %55 = vmatpush1.msra.mxu0 0.0
    %56 = vmatprep.subr.mxu0 0.0
    %57 = vmatpush1.msra.mxu0 0.0
    %58 = vmatprep.subr.mxu0 0.0
    %59 = vmatpush1.msra.mxu0 0.0
    %60 = vmatprep.subr.mxu0 0.0
    %61 = vmatpush1.msra.mxu0 0.0
    %62 = vmatprep.subr.mxu0 0.0
    %63 = vmatpush1.msra.mxu0 0.0
    %64 = vmatprep.subr.mxu0 0.0
    %65 = vmatpush1.msra.mxu0 0.0
    %66 = vmatprep.subr.mxu0 0.0
    %67 = vmatpush1.msra.mxu0 0.0
    %68 = vmatprep.subr.mxu0 0.0
    %69 = vmatpush1.msra.mxu0 0.0
    %70 = vmatprep.subr.mxu0 0.0
    %71 = vmatpush1.msra.mxu0 0.0
    %72 = vmatprep.subr.mxu0 0.0
    %73 = vmatpush1.msra.mxu0 0.0
    %74 = vmatprep.subr.mxu0 0.0
    %75 = vmatpush1.msra.mxu0 0.0
    %76 = vmatprep.subr.mxu0 0.0
    %77 = vmatpush1.msra.mxu0 0.0
    %78 = vmatprep.subr.mxu0 0.0
    %79 = vmatpush1.msra.mxu0 0.0
    %80 = vmatprep.subr.mxu0 0.0
    %81 = vmatpush1.msra.mxu0 0.0
    %82 = vmatprep.subr.mxu0 0.0
    %83 = vmatpush1.msra.mxu0 0.0
    %84 = vmatprep.subr.mxu0 0.0
    %85 = vmatpush1.msra.mxu0 0.0
    %86 = vmatprep.subr.mxu0 0.0
    %87 = vmatpush1.msra.mxu0 0.0
    %88 = vmatprep.subr.mxu0 0.0
    %89 = vmatpush1.msra.mxu0 0.0
    %90 = vmatprep.subr.mxu0 0.0
    %91 = vmatpush1.msra.mxu0 0.0
    %92 = vmatprep.mubr.f32.mxu0 0.0
    %93 = vmatmul.mubr.f32.gmra.mrb[0].mxu0 %v22
    %v94 = vpop.f32.mrb[0].mxu0
    %v95 = vadd.f32 %v19, %v94
    %v96 = vpop.f32.mrb[0].mxu0
    %97 = vdwg.mxu0
    %98 = vst.msk [vmem:[#allocation2] sm:$0xff] %vm20, %v95
    %v99 = vld [vmem:[#allocation2] sm:$0x1]
    %v100 = vmul.f32 %v12, 0.0
    %v101 = vmul.f32 %v13, 0.0
    %v102 = vadd.f32 %v100, %v101
    %v103 = vmul.f32 %v14, 0.0
    %v104 = vadd.f32 %v102, %v103
    %v105 = vmul.f32 %v15, 0.0
    %v106 = vadd.f32 %v104, %v105
    %v107 = vadd.f32 %v99, %v106
    %v108 = vtanh.pop %v107
    %vm109 = vcmask 24576
    %110 = vst.msk [vmem:[#allocation3] sm:$0x1] %vm109, %v108
    %v111 = vld [vmem:[#allocation2 + $0x1] sm:$0x1]
    %113 = vset.pattern.permute.xlu0 0
    %114 = vperm.xlu0 %113, %v108
    %v115 = vpop.permute.xlu0 %114
    %v117 = vmul.f32 %v115, %v12
    %118 = vset.pattern.permute.xlu0 1
    %119 = vperm.xlu0 %118, %v108
    %v120 = vpop.permute.xlu0 %119
    %v122 = vmul.f32 %v120, %v13
    %v123 = vadd.f32 %v117, %v122
    %124 = vset.pattern.permute.xlu0 2
    %125 = vperm.xlu0 %124, %v108
    %v126 = vpop.permute.xlu0 %125
    %v128 = vmul.f32 %v126, %v14
    %v129 = vadd.f32 %v123, %v128
    %130 = vset.pattern.permute.xlu0 3
    %131 = vperm.xlu0 %130, %v108
    %v132 = vpop.permute.xlu0 %131
    %v134 = vmul.f32 %v132, %v15
    %v135 = vadd.f32 %v129, %v134
    %v136 = vadd.f32 %v111, %v135
    %v137 = vtanh.pop %v136
    %139 = vrot.lane.b32.xlu0 %v137, 4
    %v140 = vpop.permute.xlu0 %139
    %vm142 = vcmask 57376
    %143 = vst.msk [vmem:[#allocation3] sm:$0x1] %vm142, %v140
    %v144 = vld [vmem:[#allocation2 + $0x2] sm:$0x1]
    %145 = vset.pattern.permute.xlu0 0
    %146 = vperm.xlu0 %145, %v137
    %v147 = vpop.permute.xlu0 %146
    %v149 = vmul.f32 %v147, %v12
    %150 = vset.pattern.permute.xlu0 1
    %151 = vperm.xlu0 %150, %v137
    %v152 = vpop.permute.xlu0 %151
    %v154 = vmul.f32 %v152, %v13
    %v155 = vadd.f32 %v149, %v154
    %156 = vset.pattern.permute.xlu0 2
    %157 = vperm.xlu0 %156, %v137
    %v158 = vpop.permute.xlu0 %157
    %v160 = vmul.f32 %v158, %v14
    %v161 = vadd.f32 %v155, %v160
    %162 = vset.pattern.permute.xlu0 3
    %163 = vperm.xlu0 %162, %v137
    %v164 = vpop.permute.xlu0 %163
    %v166 = vmul.f32 %v164, %v15
    %v167 = vadd.f32 %v161, %v166
    %v168 = vadd.f32 %v144, %v167
    %v169 = vtanh.pop %v168
    %171 = vrot.lane.b32.xlu0 %v169, 8
    %v172 = vpop.permute.xlu0 %171
    %vm174 = vcmask 90176
    %175 = vst.msk [vmem:[#allocation3] sm:$0x1] %vm174, %v172
    %v176 = vld [vmem:[#allocation2 + $0x3] sm:$0x1]
    %177 = vset.pattern.permute.xlu0 0
    %178 = vperm.xlu0 %177, %v169
    %v179 = vpop.permute.xlu0 %178
    %v181 = vmul.f32 %v179, %v12
    %182 = vset.pattern.permute.xlu0 1
    %183 = vperm.xlu0 %182, %v169
    %v184 = vpop.permute.xlu0 %183
    %v186 = vmul.f32 %v184, %v13
    %v187 = vadd.f32 %v181, %v186
    %188 = vset.pattern.permute.xlu0 2
    %189 = vperm.xlu0 %188, %v169
    %v190 = vpop.permute.xlu0 %189
    %v192 = vmul.f32 %v190, %v14
    %v193 = vadd.f32 %v187, %v192
    %194 = vset.pattern.permute.xlu0 3
    %195 = vperm.xlu0 %194, %v169
    %v196 = vpop.permute.xlu0 %195
    %v198 = vmul.f32 %v196, %v15
    %v199 = vadd.f32 %v193, %v198
    %v200 = vadd.f32 %v176, %v199
    %v201 = vtanh.pop %v200
    %203 = vrot.lane.b32.xlu0 %v201, 12
    %v204 = vpop.permute.xlu0 %203
    %vm206 = vcmask 122976
    %207 = vst.msk [vmem:[#allocation3] sm:$0x1] %vm206, %v204
    %v208 = vld [vmem:[#allocation2 + $0x4] sm:$0x1]
    %209 = vset.pattern.permute.xlu0 0
    %210 = vperm.xlu0 %209, %v201
    %v211 = vpop.permute.xlu0 %210
    %v213 = vmul.f32 %v211, %v12
    %214 = vset.pattern.permute.xlu0 1
    %215 = vperm.xlu0 %214, %v201
    %v216 = vpop.permute.xlu0 %215
    %v218 = vmul.f32 %v216, %v13
    %v219 = vadd.f32 %v213, %v218
    %220 = vset.pattern.permute.xlu0 2
    %221 = vperm.xlu0 %220, %v201
    %v222 = vpop.permute.xlu0 %221
    %v224 = vmul.f32 %v222, %v14
    %v225 = vadd.f32 %v219, %v224
    %226 = vset.pattern.permute.xlu0 3
    %227 = vperm.xlu0 %226, %v201
    %v228 = vpop.permute.xlu0 %227
    %v230 = vmul.f32 %v228, %v15
    %v231 = vadd.f32 %v225, %v230
    %v232 = vadd.f32 %v208, %v231
    %v233 = vtanh.pop %v232
    %235 = vrot.lane.b32.xlu0 %v233, 16
    %v236 = vpop.permute.xlu0 %235
    %vm238 = vcmask 155776
    %239 = vst.msk [vmem:[#allocation3] sm:$0x1] %vm238, %v236
    %v240 = vld [vmem:[#allocation2 + $0x5] sm:$0x1]
    %241 = vset.pattern.permute.xlu0 0
    %242 = vperm.xlu0 %241, %v233
    %v243 = vpop.permute.xlu0 %242
    %v245 = vmul.f32 %v243, %v12
    %246 = vset.pattern.permute.xlu0 1
    %247 = vperm.xlu0 %246, %v233
    %v248 = vpop.permute.xlu0 %247
    %v250 = vmul.f32 %v248, %v13
    %v251 = vadd.f32 %v245, %v250
    %252 = vset.pattern.permute.xlu0 2
    %253 = vperm.xlu0 %252, %v233
    %v254 = vpop.permute.xlu0 %253
    %v256 = vmul.f32 %v254, %v14
    %v257 = vadd.f32 %v251, %v256
    %258 = vset.pattern.permute.xlu0 3
    %259 = vperm.xlu0 %258, %v233
    %v260 = vpop.permute.xlu0 %259
    %v262 = vmul.f32 %v260, %v15
    %v263 = vadd.f32 %v257, %v262
    %v264 = vadd.f32 %v240, %v263
    %v265 = vtanh.pop %v264
    %267 = vrot.lane.b32.xlu0 %v265, 20
    %v268 = vpop.permute.xlu0 %267
    %vm270 = vcmask 188576
    %271 = vst.msk [vmem:[#allocation3] sm:$0x1] %vm270, %v268
    %v272 = vld [vmem:[#allocation2 + $0x6] sm:$0x1]
    %273 = vset.pattern.permute.xlu0 0
    %274 = vperm.xlu0 %273, %v265
    %v275 = vpop.permute.xlu0 %274
    %v277 = vmul.f32 %v275, %v12
    %278 = vset.pattern.permute.xlu0 1
    %279 = vperm.xlu0 %278, %v265
    %v280 = vpop.permute.xlu0 %279
    %v282 = vmul.f32 %v280, %v13
    %v283 = vadd.f32 %v277, %v282
    %284 = vset.pattern.permute.xlu0 2
    %285 = vperm.xlu0 %284, %v265
    %v286 = vpop.permute.xlu0 %285
    %v288 = vmul.f32 %v286, %v14
    %v289 = vadd.f32 %v283, %v288
    %290 = vset.pattern.permute.xlu0 3
    %291 = vperm.xlu0 %290, %v265
    %v292 = vpop.permute.xlu0 %291
    %v294 = vmul.f32 %v292, %v15
    %v295 = vadd.f32 %v289, %v294
    %v296 = vadd.f32 %v272, %v295
    %v297 = vtanh.pop %v296
    %299 = vrot.lane.b32.xlu0 %v297, 24
    %v300 = vpop.permute.xlu0 %299
    %vm302 = vcmask 221376
    %303 = vst.msk [vmem:[#allocation3] sm:$0x1] %vm302, %v300
    %v304 = vld [vmem:[#allocation2 + $0x7] sm:$0x1]
    %305 = vset.pattern.permute.xlu0 0
    %306 = vperm.xlu0 %305, %v297
    %v307 = vpop.permute.xlu0 %306
    %v309 = vmul.f32 %v307, %v12
    %310 = vset.pattern.permute.xlu0 1
    %311 = vperm.xlu0 %310, %v297
    %v312 = vpop.permute.xlu0 %311
    %v314 = vmul.f32 %v312, %v13
    %v315 = vadd.f32 %v309, %v314
    %316 = vset.pattern.permute.xlu0 2
    %317 = vperm.xlu0 %316, %v297
    %v318 = vpop.permute.xlu0 %317
    %v320 = vmul.f32 %v318, %v14
    %v321 = vadd.f32 %v315, %v320
    %322 = vset.pattern.permute.xlu0 3
    %323 = vperm.xlu0 %322, %v297
    %v324 = vpop.permute.xlu0 %323
    %v326 = vmul.f32 %v324, %v15
    %v327 = vadd.f32 %v321, %v326
    %v328 = vadd.f32 %v304, %v327
    %v329 = vtanh.pop %v328
    %331 = vrot.lane.b32.xlu0 %v329, 28
    %v332 = vpop.permute.xlu0 %331
    %vm334 = vcmask 254176
    %335 = vst.msk [vmem:[#allocation3] sm:$0x1] %vm334, %v332
    // Predicated region
    $region6: #{tpu_custom_call.1} parent=1 // pred_check
      _
    $region7: #{tpu_custom_call.1} parent=1 // pred_check_branch
      %337 = sbr.rel (0) target = $region9
    $region8: #{tpu_custom_call.1} parent=1 // pred_region
      %s339 = ssub.s32 16, 16
      %340 = vsyncadd [#allocation4], %s339
      %s342 = sshll.u32 [#allocation3], 4
      %s343 = int_to_ptr.vmem [resolvable:$true] %s342
      %345 = dma.vmem_to_hbm [thread:$0]  %s343, 16, %s1, [#allocation4]
    $region9: #{tpu_custom_call.1} parent=1 // pred_fallthru
      _
    // Predicated region
    $region10: #{tpu_custom_call.1} parent=1 // pred_check
      _
    $region11: #{tpu_custom_call.1} parent=1 // pred_check_branch
      %347 = sbr.rel (0) target = $region13
    $region12: #{tpu_custom_call.1} parent=1 // pred_region
      %348 = dma.done [#allocation4], 16
    $region13: #{tpu_custom_call.1} parent=1 // pred_fallthru
      _
    %349 = vsyncpa [#allocation4], 1

</llo_original>
